<compile_context>
chip_gen: v6e
topology: v6e:2x2x1
jax: 0.10.0
libtpu: 0.0.40
codegen_flags: <defaults>
</compile_context>

<pallas_src>
import jax
import jax.numpy as jnp
import numpy as np
from jax.experimental import pallas as pl
from jax.experimental.pallas import tpu as pltpu


def interp_kernel(t_ref, w_ref, b_ref, za_ref, zb_ref, o_ref):
    # t_ref : (B,)            SMEM (scalar-prefetched) per-batch interpolation t
    # w_ref : (Cout, 2C + 1)  VMEM, resident 1x1 conv weight
    # b_ref : (Cout, 1)       VMEM, resident bias
    # za_ref: (1, C, HW_T)    VMEM block of z_A (batch bi, spatial tile hi)
    # zb_ref: (1, C, HW_T)    VMEM block of z_B
    # o_ref : (1, Cout, HW_T) VMEM output block
    bidx = pl.program_id(0)
    tval = t_ref[bidx].astype(jnp.float32)          # scalar read from SMEM

    C = za_ref.shape[1]
    Cout, hw_t = o_ref.shape[1], o_ref.shape[2]

    w = w_ref[...].astype(jnp.float32)              # (Cout, 2C+1), tiny
    za = za_ref[0].astype(jnp.float32)              # (C, HW_T)
    zb = zb_ref[0].astype(jnp.float32)              # (C, HW_T)

    # Fold the t-column of the weight and the bias into one per-output-channel
    # constant, then accumulate the 1x1 conv as 2C outer-product FMAs on the
    # VPU (channels are far too small to justify an MXU matmul).
    acc = w[:, 2 * C:2 * C + 1] * tval + b_ref[...]          # (Cout, 1)
    acc = jnp.broadcast_to(acc, (Cout, hw_t))                # (Cout, HW_T)
    for c in range(C):                                       # static unroll
        acc = acc + w[:, c:c + 1] * za[c:c + 1, :]
        acc = acc + w[:, C + c:C + c + 1] * zb[c:c + 1, :]

    # ReLU stand-in for the Conv2dBlock activation; single full-tile store.
    o_ref[0] = jnp.maximum(acc, 0.0).astype(o_ref.dtype)


def interp_forward(z_A, z_B, t, w, b, *, hw_tile_max=8192):
    """z_A, z_B: (B, C, H, W) NCHW.  t: (B,).  w: (Cout, 2C+1).  b: (Cout,)."""
    B, C, H, W = z_A.shape
    Cout, Win = w.shape
    assert Win == 2 * C + 1
    HW = H * W

    # Lane-dense spatial axis: pad H*W to a multiple of 128 and tile it so the
    # last dim of every block is a multiple of 128 (unmasked vst).
    hw_pad = pl.cdiv(HW, 128) * 128
    hw_tile = min(hw_pad, hw_tile_max)
    hw_pad = pl.cdiv(hw_pad, hw_tile) * hw_tile
    n_hw = hw_pad // hw_tile

    za = z_A.reshape(B, C, HW)
    zb = z_B.reshape(B, C, HW)
    if hw_pad != HW:
        pad = ((0, 0), (0, 0), (0, hw_pad - HW))
        za = jnp.pad(za, pad)
        zb = jnp.pad(zb, pad)

    t1 = t.reshape(B).astype(jnp.float32)            # scalar-prefetched to SMEM
    w2 = w.astype(jnp.float32)
    b2 = b.reshape(Cout, 1).astype(jnp.float32)

    out = pl.pallas_call(
        interp_kernel,
        out_shape=jax.ShapeDtypeStruct((B, Cout, hw_pad), z_A.dtype),
        grid_spec=pltpu.PrefetchScalarGridSpec(
            num_scalar_prefetch=1,                   # t -> SMEM
            grid=(B, n_hw),
            in_specs=[
                # weight / bias: constant block index -> stays resident.
                pl.BlockSpec((Cout, Win), lambda bi, hi, t_s: (0, 0)),
                pl.BlockSpec((Cout, 1), lambda bi, hi, t_s: (0, 0)),
                # activations: one batch element x one lane-dense spatial tile.
                pl.BlockSpec((1, C, hw_tile), lambda bi, hi, t_s: (bi, 0, hi)),
                pl.BlockSpec((1, C, hw_tile), lambda bi, hi, t_s: (bi, 0, hi)),
            ],
            out_specs=pl.BlockSpec((1, Cout, hw_tile),
                                   lambda bi, hi, t_s: (bi, 0, hi)),
        ),
        compiler_params=pltpu.CompilerParams(
            # Independent axes: lets v7x's 2 TensorCores split the work; no-op
            # on single-core v5e/v6e.
            dimension_semantics=("parallel", "parallel"),
        ),
    )(t1, w2, b2, za, zb)

    return out[:, :, :HW].reshape(B, Cout, H, W)


def interp_reference(z_A, z_B, t, w, b):
    """Pure-JAX reference mirroring the PyTorch forward (+ 1x1 conv stand-in)."""
    B, C, H, W = z_A.shape
    t4 = t[:, None, None, None].astype(z_A.dtype)
    z_abt = jnp.concatenate(
        [z_A, z_B, jnp.broadcast_to(t4, (B, 1, H, W))], axis=1
    )
    out = jnp.einsum("oc,bchw->bohw", w, z_abt) + b[None, :, None, None]
    return jnp.maximum(out, 0.0)


if __name__ == "__main__":
    # Module hyperparams implied by __init__: z_dim = channel count of z_A/z_B.
    B, z_dim, H, W = 2, 4, 16, 16
    Cin = 2 * z_dim + 1   # channels after torch.cat
    Cout = z_dim          # 1x1 Conv2dBlock projects back to z_dim

    key = jax.random.PRNGKey(0)
    k_za, k_zb, k_t, k_w, k_b = jax.random.split(key, 5)

    z_A = jax.random.normal(k_za, (B, z_dim, H, W), dtype=jnp.float32)
    z_B = jax.random.normal(k_zb, (B, z_dim, H, W), dtype=jnp.float32)
    t = jax.random.uniform(k_t, (B,), dtype=jnp.float32)

    # Deterministic synthetic 1x1 conv parameters.
    w = 0.1 * jax.random.normal(k_w, (Cout, Cin), dtype=jnp.float32)
    b = 0.1 * jax.random.normal(k_b, (Cout,), dtype=jnp.float32)

    out = interp_forward(z_A, z_B, t, w, b)
    out = jax.block_until_ready(out)

    ref = interp_reference(z_A, z_B, t, w, b)
    np.testing.assert_allclose(np.asarray(out), np.asarray(ref),
                               rtol=1e-5, atol=1e-5)

    print("KERNEL_OK")
</pallas_src>

<mosaic_0001>
module attributes {stable_mosaic.version = 11 : i64} {
  func.func @interp_kernel(%arg0: i32, %arg1: i32, %arg2: memref<2xf32, #tpu.memory_space<smem>>, %arg3: memref<4x9xf32, #tpu.memory_space<vmem>>, %arg4: memref<4x1xf32, #tpu.memory_space<vmem>>, %arg5: memref<1x4x256xf32, #tpu.memory_space<vmem>>, %arg6: memref<1x4x256xf32, #tpu.memory_space<vmem>>, %arg7: memref<1x4x256xf32, #tpu.memory_space<vmem>>) attributes {dimension_semantics = [#tpu.dimension_semantics<parallel>, #tpu.dimension_semantics<parallel>], iteration_bounds = array<i64: 2, 1>, scalar_prefetch = 1 : i64, scratch_operands = 0 : i64, tpu.core_type = #tpu.core_type<tc>, window_params = [{pipeline_mode = #tpu.pipeline_mode<synchronous>, transform_indices = @transform_0, window_bounds = array<i64: 4, 9>}, {pipeline_mode = #tpu.pipeline_mode<synchronous>, transform_indices = @transform_1, window_bounds = array<i64: 4, 1>}, {transform_indices = @transform_2, window_bounds = array<i64: 1, 4, 256>}, {transform_indices = @transform_3, window_bounds = array<i64: 1, 4, 256>}, {transform_indices = @transform_4, window_bounds = array<i64: 1, 4, 256>}]} {
    %0 = arith.index_cast %arg0 : i32 to index
    %1 = memref.load %arg2[%0] : memref<2xf32, #tpu.memory_space<smem>>
    %c0 = arith.constant 0 : index
    %c0_0 = arith.constant 0 : index
    %2 = vector.load %arg3[%c0, %c0_0] : memref<4x9xf32, #tpu.memory_space<vmem>>, vector<4x9xf32>
    %c0_1 = arith.constant 0 : index
    %c0_2 = arith.constant 0 : index
    %c0_3 = arith.constant 0 : index
    %3 = vector.load %arg5[%c0_1, %c0_2, %c0_3] : memref<1x4x256xf32, #tpu.memory_space<vmem>>, vector<1x4x256xf32>
    %4 = vector.shape_cast %3 : vector<1x4x256xf32> to vector<4x256xf32>
    %c0_4 = arith.constant 0 : index
    %c0_5 = arith.constant 0 : index
    %c0_6 = arith.constant 0 : index
    %5 = vector.load %arg6[%c0_4, %c0_5, %c0_6] : memref<1x4x256xf32, #tpu.memory_space<vmem>>, vector<1x4x256xf32>
    %6 = vector.shape_cast %5 : vector<1x4x256xf32> to vector<4x256xf32>
    %7 = vector.extract_strided_slice %2 {offsets = [0, 8], sizes = [4, 1], strides = [1, 1]} : vector<4x9xf32> to vector<4x1xf32>
    %8 = vector.broadcast %1 : f32 to vector<4x1xf32>
    %9 = arith.mulf %7, %8 : vector<4x1xf32>
    %c0_7 = arith.constant 0 : index
    %c0_8 = arith.constant 0 : index
    %10 = vector.load %arg4[%c0_7, %c0_8] : memref<4x1xf32, #tpu.memory_space<vmem>>, vector<4x1xf32>
    %11 = arith.addf %9, %10 : vector<4x1xf32>
    %12 = vector.shape_cast %11 : vector<4x1xf32> to vector<4x1xf32>
    %13 = vector.broadcast %12 : vector<4x1xf32> to vector<4x256xf32>
    %14 = vector.extract_strided_slice %2 {offsets = [0, 0], sizes = [4, 1], strides = [1, 1]} : vector<4x9xf32> to vector<4x1xf32>
    %15 = vector.extract_strided_slice %4 {offsets = [0, 0], sizes = [1, 256], strides = [1, 1]} : vector<4x256xf32> to vector<1x256xf32>
    %16 = vector.broadcast %14 : vector<4x1xf32> to vector<4x256xf32>
    %17 = vector.broadcast %15 : vector<1x256xf32> to vector<4x256xf32>
    %18 = arith.mulf %16, %17 : vector<4x256xf32>
    %19 = arith.addf %13, %18 : vector<4x256xf32>
    %20 = vector.extract_strided_slice %2 {offsets = [0, 4], sizes = [4, 1], strides = [1, 1]} : vector<4x9xf32> to vector<4x1xf32>
    %21 = vector.extract_strided_slice %6 {offsets = [0, 0], sizes = [1, 256], strides = [1, 1]} : vector<4x256xf32> to vector<1x256xf32>
    %22 = vector.broadcast %20 : vector<4x1xf32> to vector<4x256xf32>
    %23 = vector.broadcast %21 : vector<1x256xf32> to vector<4x256xf32>
    %24 = arith.mulf %22, %23 : vector<4x256xf32>
    %25 = arith.addf %19, %24 : vector<4x256xf32>
    %26 = vector.extract_strided_slice %2 {offsets = [0, 1], sizes = [4, 1], strides = [1, 1]} : vector<4x9xf32> to vector<4x1xf32>
    %27 = vector.extract_strided_slice %4 {offsets = [1, 0], sizes = [1, 256], strides = [1, 1]} : vector<4x256xf32> to vector<1x256xf32>
    %28 = vector.broadcast %26 : vector<4x1xf32> to vector<4x256xf32>
    %29 = vector.broadcast %27 : vector<1x256xf32> to vector<4x256xf32>
    %30 = arith.mulf %28, %29 : vector<4x256xf32>
    %31 = arith.addf %25, %30 : vector<4x256xf32>
    %32 = vector.extract_strided_slice %2 {offsets = [0, 5], sizes = [4, 1], strides = [1, 1]} : vector<4x9xf32> to vector<4x1xf32>
    %33 = vector.extract_strided_slice %6 {offsets = [1, 0], sizes = [1, 256], strides = [1, 1]} : vector<4x256xf32> to vector<1x256xf32>
    %34 = vector.broadcast %32 : vector<4x1xf32> to vector<4x256xf32>
    %35 = vector.broadcast %33 : vector<1x256xf32> to vector<4x256xf32>
    %36 = arith.mulf %34, %35 : vector<4x256xf32>
    %37 = arith.addf %31, %36 : vector<4x256xf32>
    %38 = vector.extract_strided_slice %2 {offsets = [0, 2], sizes = [4, 1], strides = [1, 1]} : vector<4x9xf32> to vector<4x1xf32>
    %39 = vector.extract_strided_slice %4 {offsets = [2, 0], sizes = [1, 256], strides = [1, 1]} : vector<4x256xf32> to vector<1x256xf32>
    %40 = vector.broadcast %38 : vector<4x1xf32> to vector<4x256xf32>
    %41 = vector.broadcast %39 : vector<1x256xf32> to vector<4x256xf32>
    %42 = arith.mulf %40, %41 : vector<4x256xf32>
    %43 = arith.addf %37, %42 : vector<4x256xf32>
    %44 = vector.extract_strided_slice %2 {offsets = [0, 6], sizes = [4, 1], strides = [1, 1]} : vector<4x9xf32> to vector<4x1xf32>
    %45 = vector.extract_strided_slice %6 {offsets = [2, 0], sizes = [1, 256], strides = [1, 1]} : vector<4x256xf32> to vector<1x256xf32>
    %46 = vector.broadcast %44 : vector<4x1xf32> to vector<4x256xf32>
    %47 = vector.broadcast %45 : vector<1x256xf32> to vector<4x256xf32>
    %48 = arith.mulf %46, %47 : vector<4x256xf32>
    %49 = arith.addf %43, %48 : vector<4x256xf32>
    %50 = vector.extract_strided_slice %2 {offsets = [0, 3], sizes = [4, 1], strides = [1, 1]} : vector<4x9xf32> to vector<4x1xf32>
    %51 = vector.extract_strided_slice %4 {offsets = [3, 0], sizes = [1, 256], strides = [1, 1]} : vector<4x256xf32> to vector<1x256xf32>
    %52 = vector.broadcast %50 : vector<4x1xf32> to vector<4x256xf32>
    %53 = vector.broadcast %51 : vector<1x256xf32> to vector<4x256xf32>
    %54 = arith.mulf %52, %53 : vector<4x256xf32>
    %55 = arith.addf %49, %54 : vector<4x256xf32>
    %56 = vector.extract_strided_slice %2 {offsets = [0, 7], sizes = [4, 1], strides = [1, 1]} : vector<4x9xf32> to vector<4x1xf32>
    %57 = vector.extract_strided_slice %6 {offsets = [3, 0], sizes = [1, 256], strides = [1, 1]} : vector<4x256xf32> to vector<1x256xf32>
    %58 = vector.broadcast %56 : vector<4x1xf32> to vector<4x256xf32>
    %59 = vector.broadcast %57 : vector<1x256xf32> to vector<4x256xf32>
    %60 = arith.mulf %58, %59 : vector<4x256xf32>
    %61 = arith.addf %55, %60 : vector<4x256xf32>
    %cst = arith.constant 0.000000e+00 : f32
    %62 = vector.broadcast %cst : f32 to vector<4x256xf32>
    %63 = arith.maximumf %61, %62 : vector<4x256xf32>
    %c0_9 = arith.constant 0 : index
    %c0_10 = arith.constant 0 : index
    %c0_11 = arith.constant 0 : index
    %64 = vector.load %arg7[%c0_9, %c0_10, %c0_11] : memref<1x4x256xf32, #tpu.memory_space<vmem>>, vector<1x4x256xf32>
    %65 = vector.shape_cast %64 : vector<1x4x256xf32> to vector<4x256xf32>
    %66 = vector.shape_cast %63 : vector<4x256xf32> to vector<1x4x256xf32>
    tpu.vector_store %arg7[%c0_9, %c0_10, %c0_11], %66 {strides = array<i32>} : memref<1x4x256xf32, #tpu.memory_space<vmem>>, vector<1x4x256xf32>,
    return
  }
  func.func @transform_0(%arg0: i32, %arg1: i32, %arg2: memref<2xf32, #tpu.memory_space<smem>>) -> (i32, i32) {
    %c0_i32 = arith.constant 0 : i32
    %c0_i32_0 = arith.constant 0 : i32
    %c0_i32_1 = arith.constant 0 : i32
    return %c0_i32, %c0_i32_0 : i32, i32
  }
  func.func @transform_1(%arg0: i32, %arg1: i32, %arg2: memref<2xf32, #tpu.memory_space<smem>>) -> (i32, i32) {
    %c0_i32 = arith.constant 0 : i32
    %c0_i32_0 = arith.constant 0 : i32
    %c0_i32_1 = arith.constant 0 : i32
    return %c0_i32, %c0_i32_0 : i32, i32
  }
  func.func @transform_2(%arg0: i32, %arg1: i32, %arg2: memref<2xf32, #tpu.memory_space<smem>>) -> (i32, i32, i32) {
    %c0_i32 = arith.constant 0 : i32
    %c0_i32_0 = arith.constant 0 : i32
    return %arg0, %c0_i32, %arg1 : i32, i32, i32
  }
  func.func @transform_3(%arg0: i32, %arg1: i32, %arg2: memref<2xf32, #tpu.memory_space<smem>>) -> (i32, i32, i32) {
    %c0_i32 = arith.constant 0 : i32
    %c0_i32_0 = arith.constant 0 : i32
    return %arg0, %c0_i32, %arg1 : i32, i32, i32
  }
  func.func @transform_4(%arg0: i32, %arg1: i32, %arg2: memref<2xf32, #tpu.memory_space<smem>>) -> (i32, i32, i32) {
    %c0_i32 = arith.constant 0 : i32
    %c0_i32_0 = arith.constant 0 : i32
    return %arg0, %c0_i32, %arg1 : i32, i32, i32
  }
}

</mosaic_0001>

<llo_original>
// kernel: tpu_custom_call.1
$region0: #{tpu_custom_call.1}
  #allocation0 [shape = 'u32[]', space=smem, size = 0x4, offset = 0x4, fixed_abs, tag = 'smem constant byte address 0x4 - core index']
  #allocation1 [shape = 'u32[144,128]{1,0:T(1,128)}', space=vmem, size = 0x12000, scoped, tag = 'internal scratch']
  #allocation2 [shape = 's32[1]{0}', space=sflag, size = 0x4, scoped, tag = 'scoped memory for tpu_custom_call.1']
  #allocation3 [shape = 'u8[512]{0}', space=smem, size = 0x200, scoped, tag = 'prefetched SMEM operand 0']
  %s0 = inlined_call_operand.vmem [shape: f32[2], index: 0, kind: input, shape index: {}]
  %s1 = inlined_call_operand.vmem [shape: f32[4,9], index: 1, kind: input, shape index: {}]
  %s2 = inlined_call_operand.vmem [shape: f32[4,1], index: 2, kind: input, shape index: {}]
  %s3 = inlined_call_operand.hbm [shape: f32[2,4,256], index: 3, kind: input, shape index: {}]
  %s4 = inlined_call_operand.hbm [shape: f32[2,4,256], index: 4, kind: input, shape index: {}]
  %s5 = inlined_call_operand.hbm [shape: f32[2,4,256], index: 5, kind: output, shape index: {}]
  %s6 = sld [smem:[#allocation0]]
  $region57: #{tpu_custom_call.1} parent=0
    _
  %s8 = ssub.s32 1, %s6
  %s9 = scalar_select 0, %s8, %s6
  %s10 = sshll.u32 %s0, 4
  %s11 = int_to_ptr.vmem [resolvable:$true] %s10
  %13 = dma.vmem_to_smem %s11, 16, [#allocation3], [#allocation2]
  %14 = dma.done [#allocation2], 16
  %15 = sfence
  $region1: #{tpu_custom_call.1} parent=0
    #allocation4 [shape = 'u8[8192]{0}', space=vmem, size = 0x2000, scoped, tag = 'input window, operand 3']
    #allocation5 [shape = 's32[2]{0}', space=sflag, size = 0x8, scoped, tag = 'scoped memory for tpu_custom_call.1']
    #allocation6 [shape = 's32[2]{0}', space=sflag, size = 0x8, scoped, tag = 'scoped memory for tpu_custom_call.1']
    #allocation7 [shape = 'u8[8192]{0}', space=vmem, size = 0x2000, scoped, tag = 'input window, operand 4']
    #allocation8 [shape = 's32[2]{0}', space=sflag, size = 0x8, scoped, tag = 'scoped memory for tpu_custom_call.1']
    #allocation9 [shape = 'u8[8192]{0}', space=vmem, size = 0x2000, scoped, tag = 'output window, operand 0']
    %16 = vsyncpa [#allocation5], 0
    %s17 = scalar_lea.sflag [#allocation5], 1
    %18 = vsyncpa %s17, 0
    %19 = vsyncpa [#allocation8], 0
    %s20 = scalar_lea.sflag [#allocation8], 1
    %21 = vsyncpa %s20, 0
    %22 = vsyncpa [#allocation6], 0
    %s23 = scalar_lea.sflag [#allocation6], 1
    %24 = vsyncpa %s23, 0
    loop: start=0, step=1, limit=4
    $region2: #{tpu_custom_call.1} parent=1 // loop_pre_header
      _
    $region3: #{tpu_custom_call.1} parent=1 // loop_header
      %s26 = sphi 0, %s30
      %p27 = scmp.ge.s32.totalorder %s26, 4
      %s33 = sphi 0, %s45
      %s34 = sphi 0, %s41
      %s35 = sphi 0, %s33
      %s36 = sphi 0, %s34
      %s37 = sphi 0, %s35
      %s38 = sphi 0, %s36
      %s46 = sphi 0, %s46
      %s48 = sphi 0, %s46
      %s49 = sphi 0, %s48
      %s63 = sphi 0, %s49
      %s67 = sphi 0, %s67
      %s69 = sphi 0, %s67
      %s70 = sphi 0, %s69
      %s84 = sphi 0, %s70
      %s92 = sphi 0, %s94
      %s95 = sphi 0, %s92
      %s96 = sphi 0, %s95
      %s112 = sphi 0, %s96
      %s120 = sphi 0, %s122
      %s123 = sphi 0, %s120
      %s124 = sphi 0, %s123
      %s140 = sphi 0, %s124
      %s148 = sphi 0, %s150
      %s151 = sphi 0, %s148
      %s152 = sphi 0, %s151
      %s168 = sphi 0, %s152
    $region4: #{tpu_custom_call.1} parent=1 // loop_header_branch
      %29 = sbr.rel (%p27) target = $region8
    $region5: #{tpu_custom_call.1} parent=1 // loop_body
      %s31 = ssub.s32 %s26, 1
      %s32 = ssub.s32 %s26, 2
      %s39 = sadd.s32 1, %s34
      %p40 = scmp.ge.s32.totalorder %s39, 1
      %s41 = scalar_select %p40, 0, %s39
      %s42 = sadd.s32 1, %s33
      %s43 = scalar_select %p40, %s42, %s33
      %p44 = scmp.ge.s32.totalorder %s43, 2
      %s45 = scalar_select %p44, 0, %s43
      %s47 = sadd.s32 %s46, 1
      %p50 = scmp.eq.s32.totalorder %s26, 1
      %p51 = scmp.ne.s32.totalorder %s46, %s48
      %p52 = scmp.eq.s32.totalorder %s26, 0
      %p53 = por %p51, %p52
      %p54 = scmp.ne.s32.totalorder %s46, %s48
      %p55 = scmp.eq.s32.totalorder %s31, 1
      %p56 = por %p54, %p55
      %p57 = scmp.ne.s32.totalorder %s48, %s49
      %p58 = scmp.eq.s32.totalorder %s31, 0
      %p59 = por %p57, %p58
      %p60 = scmp.ne.s32.totalorder %s48, %s49
      %p61 = scmp.eq.s32.totalorder %s32, 1
      %p62 = por %p60, %p61
      %p64 = scmp.ne.s32.totalorder %s49, %s63
      %p65 = scmp.eq.s32.totalorder %s32, 0
      %p66 = por %p64, %p65
      %s68 = sadd.s32 %s67, 1
      %p71 = scmp.eq.s32.totalorder %s26, 1
      %p72 = scmp.ne.s32.totalorder %s67, %s69
      %p73 = scmp.eq.s32.totalorder %s26, 0
      %p74 = por %p72, %p73
      %p75 = scmp.ne.s32.totalorder %s67, %s69
      %p76 = scmp.eq.s32.totalorder %s31, 1
      %p77 = por %p75, %p76
      %p78 = scmp.ne.s32.totalorder %s69, %s70
      %p79 = scmp.eq.s32.totalorder %s31, 0
      %p80 = por %p78, %p79
      %p81 = scmp.ne.s32.totalorder %s69, %s70
      %p82 = scmp.eq.s32.totalorder %s32, 1
      %p83 = por %p81, %p82
      %p85 = scmp.ne.s32.totalorder %s70, %s84
      %p86 = scmp.eq.s32.totalorder %s32, 0
      %p87 = por %p85, %p86
      %s88 = ssub.s32 %s33, %s45
      %s89 = ssub.s32 %s34, %s41
      %s90 = sor.u32 %s88, %s89
      %p91 = scmp.eq.s32.totalorder %s90, 0
      %s93 = sadd.s32 %s92, 1
      %s94 = scalar_select %p91, %s92, %s93
      %p97 = pneg %p91
      %p98 = scmp.eq.s32.totalorder %s26, 1
      %p99 = por %p97, %p98
      %p100 = scmp.ne.s32.totalorder %s92, %s95
      %p101 = scmp.eq.s32.totalorder %s26, 0
      %p102 = por %p100, %p101
      %p103 = scmp.ne.s32.totalorder %s92, %s95
      %p104 = scmp.eq.s32.totalorder %s31, 1
      %p105 = por %p103, %p104
      %p106 = scmp.ne.s32.totalorder %s95, %s96
      %p107 = scmp.eq.s32.totalorder %s31, 0
      %p108 = por %p106, %p107
      %p109 = scmp.ne.s32.totalorder %s95, %s96
      %p110 = scmp.eq.s32.totalorder %s32, 1
      %p111 = por %p109, %p110
      %p113 = scmp.ne.s32.totalorder %s96, %s112
      %p114 = scmp.eq.s32.totalorder %s32, 0
      %p115 = por %p113, %p114
      %s116 = ssub.s32 %s33, %s45
      %s117 = ssub.s32 %s34, %s41
      %s118 = sor.u32 %s116, %s117
      %p119 = scmp.eq.s32.totalorder %s118, 0
      %s121 = sadd.s32 %s120, 1
      %s122 = scalar_select %p119, %s120, %s121
      %p125 = pneg %p119
      %p126 = scmp.eq.s32.totalorder %s26, 1
      %p127 = por %p125, %p126
      %p128 = scmp.ne.s32.totalorder %s120, %s123
      %p129 = scmp.eq.s32.totalorder %s26, 0
      %p130 = por %p128, %p129
      %p131 = scmp.ne.s32.totalorder %s120, %s123
      %p132 = scmp.eq.s32.totalorder %s31, 1
      %p133 = por %p131, %p132
      %p134 = scmp.ne.s32.totalorder %s123, %s124
      %p135 = scmp.eq.s32.totalorder %s31, 0
      %p136 = por %p134, %p135
      %p137 = scmp.ne.s32.totalorder %s123, %s124
      %p138 = scmp.eq.s32.totalorder %s32, 1
      %p139 = por %p137, %p138
      %p141 = scmp.ne.s32.totalorder %s124, %s140
      %p142 = scmp.eq.s32.totalorder %s32, 0
      %p143 = por %p141, %p142
      %s144 = ssub.s32 %s33, %s45
      %s145 = ssub.s32 %s34, %s41
      %s146 = sor.u32 %s144, %s145
      %p147 = scmp.eq.s32.totalorder %s146, 0
      %s149 = sadd.s32 %s148, 1
      %s150 = scalar_select %p147, %s148, %s149
      %p153 = pneg %p147
      %p154 = scmp.eq.s32.totalorder %s26, 1
      %p155 = por %p153, %p154
      %p156 = scmp.ne.s32.totalorder %s148, %s151
      %p157 = scmp.eq.s32.totalorder %s26, 0
      %p158 = por %p156, %p157
      %p159 = scmp.ne.s32.totalorder %s148, %s151
      %p160 = scmp.eq.s32.totalorder %s31, 1
      %p161 = por %p159, %p160
      %p162 = scmp.ne.s32.totalorder %s151, %s152
      %p163 = scmp.eq.s32.totalorder %s31, 0
      %p164 = por %p162, %p163
      %p165 = scmp.ne.s32.totalorder %s151, %s152
      %p166 = scmp.eq.s32.totalorder %s32, 1
      %p167 = por %p165, %p166
      %p169 = scmp.ne.s32.totalorder %s152, %s168
      %p170 = scmp.eq.s32.totalorder %s32, 0
      %p171 = por %p169, %p170
      %p172 = scmp.le.s32.totalorder 1, %s26
      %p173 = scmp.lt.s32.totalorder %s26, 3
      %p174 = pnand %p172, %p173
      %p175 = pneg %p174
      // Predicated region
      $region9: #{tpu_custom_call.1} parent=5 // pred_check
        _
      $region10: #{tpu_custom_call.1} parent=5 // pred_check_branch
        %177 = sbr.rel (%p174) target = $region12
      $region11: #{tpu_custom_call.1} parent=5 // pred_region
        %s178 = ssub.s32 %s26, 1
        // Predicated region
        $region13: #{tpu_custom_call.1} parent=11 // pred_check
          %p179 = pneg %p59
        $region14: #{tpu_custom_call.1} parent=11 // pred_check_branch
          %181 = sbr.rel (%p179) target = $region16
        $region15: #{tpu_custom_call.1} parent=11 // pred_region
          _
        $region16: #{tpu_custom_call.1} parent=11 // pred_fallthru
          _
        // Predicated region
        $region17: #{tpu_custom_call.1} parent=11 // pred_check
          %p182 = pneg %p80
        $region18: #{tpu_custom_call.1} parent=11 // pred_check_branch
          %184 = sbr.rel (%p182) target = $region20
        $region19: #{tpu_custom_call.1} parent=11 // pred_region
          _
        $region20: #{tpu_custom_call.1} parent=11 // pred_fallthru
          _
      $region12: #{tpu_custom_call.1} parent=5 // pred_fallthru
        _
      %p185 = scmp.lt.s32.totalorder %s26, 2
      // Predicated region
      $region21: #{tpu_custom_call.1} parent=5 // pred_check
        %p186 = pneg %p185
      $region22: #{tpu_custom_call.1} parent=5 // pred_check_branch
        %188 = sbr.rel (%p186) target = $region24
      $region23: #{tpu_custom_call.1} parent=5 // pred_region
        // Predicated region
        $region25: #{tpu_custom_call.1} parent=23 // pred_check
          %p189 = pneg %p102
        $region26: #{tpu_custom_call.1} parent=23 // pred_check_branch
          %191 = sbr.rel (%p189) target = $region28
        $region27: #{tpu_custom_call.1} parent=23 // pred_region
          %s192 = sand.u32 %s92, 1
          %s193 = scalar_lea.sflag [#allocation5], %s192
          %s194 = sand.u32 %s92, 1
          %s195 = smul.addr %s194, 8
          %s196 = scalar_lea.vmem [#allocation4], %s195
          %s197 = smul.u32 2, %s34
          %s199 = ssub.s32 128, 128
          %200 = vsyncadd %s193, %s199
          %s201 = smul.addr %s33, 2
          %s202 = sadd.s32 %s197, %s201
          %s203 = smul.addr %s202, 64
          %s204 = scalar_lea.hbm %s3, %s203
          %s206 = sshll.u32 %s196, 4
          %s207 = int_to_ptr.vmem [resolvable:$true] %s206
          %209 = dma.hbm_to_vmem [thread:$0]  %s204, 128, %s207, %s193
        $region28: #{tpu_custom_call.1} parent=23 // pred_fallthru
          _
        // Predicated region
        $region29: #{tpu_custom_call.1} parent=23 // pred_check
          %p210 = pneg %p130
        $region30: #{tpu_custom_call.1} parent=23 // pred_check_branch
          %212 = sbr.rel (%p210) target = $region32
        $region31: #{tpu_custom_call.1} parent=23 // pred_region
          %s213 = sand.u32 %s120, 1
          %s214 = scalar_lea.sflag [#allocation8], %s213
          %s215 = sand.u32 %s120, 1
          %s216 = smul.addr %s215, 8
          %s217 = scalar_lea.vmem [#allocation7], %s216
          %s218 = smul.u32 2, %s34
          %s220 = ssub.s32 128, 128
          %221 = vsyncadd %s214, %s220
          %s222 = smul.addr %s33, 2
          %s223 = sadd.s32 %s218, %s222
          %s224 = smul.addr %s223, 64
          %s225 = scalar_lea.hbm %s4, %s224
          %s227 = sshll.u32 %s217, 4
          %s228 = int_to_ptr.vmem [resolvable:$true] %s227
          %230 = dma.hbm_to_vmem [thread:$0]  %s225, 128, %s228, %s214
        $region32: #{tpu_custom_call.1} parent=23 // pred_fallthru
          _
      $region24: #{tpu_custom_call.1} parent=5 // pred_fallthru
        _
      %p231 = scmp.le.s32.totalorder 1, %s26
      %p232 = scmp.lt.s32.totalorder %s26, 3
      %p233 = pnand %p231, %p232
      %p234 = pneg %p233
      // Predicated region
      $region33: #{tpu_custom_call.1} parent=5 // pred_check
        _
      $region34: #{tpu_custom_call.1} parent=5 // pred_check_branch
        %236 = sbr.rel (%p233) target = $region36
      $region35: #{tpu_custom_call.1} parent=5 // pred_region
        %s237 = ssub.s32 %s26, 1
        %s238 = sand.u32 %s95, 1
        %s239 = scalar_lea.sflag [#allocation5], %s238
        %s240 = sand.u32 %s95, 1
        %s241 = smul.addr %s240, 8
        %s242 = scalar_lea.vmem [#allocation4], %s241
        // Predicated region
        $region37: #{tpu_custom_call.1} parent=35 // pred_check
          %p243 = pneg %p108
        $region38: #{tpu_custom_call.1} parent=35 // pred_check_branch
          %245 = sbr.rel (%p243) target = $region40
        $region39: #{tpu_custom_call.1} parent=35 // pred_region
          %246 = dma.done %s239, 128
        $region40: #{tpu_custom_call.1} parent=35 // pred_fallthru
          _
        %s247 = sand.u32 %s123, 1
        %s248 = scalar_lea.sflag [#allocation8], %s247
        %s249 = sand.u32 %s123, 1
        %s250 = smul.addr %s249, 8
        %s251 = scalar_lea.vmem [#allocation7], %s250
        // Predicated region
        $region41: #{tpu_custom_call.1} parent=35 // pred_check
          %p252 = pneg %p136
        $region42: #{tpu_custom_call.1} parent=35 // pred_check_branch
          %254 = sbr.rel (%p252) target = $region44
        $region43: #{tpu_custom_call.1} parent=35 // pred_region
          %255 = dma.done %s248, 128
        $region44: #{tpu_custom_call.1} parent=35 // pred_fallthru
          _
        %p256 = pneg %p59
        %p257 = pneg %p56
        %p258 = pneg %p80
        %p259 = pneg %p77
        %s260 = sand.u32 %s95, 1
        %s261 = scalar_lea.sflag [#allocation5], %s260
        %s262 = sand.u32 %s95, 1
        %s263 = smul.addr %s262, 8
        %s264 = scalar_lea.vmem [#allocation4], %s263
        %p265 = pneg %p108
        %p266 = pneg %p105
        %s267 = sand.u32 %s123, 1
        %s268 = scalar_lea.sflag [#allocation8], %s267
        %s269 = sand.u32 %s123, 1
        %s270 = smul.addr %s269, 8
        %s271 = scalar_lea.vmem [#allocation7], %s270
        %p272 = pneg %p136
        %p273 = pneg %p133
        %p274 = pneg %p164
        %p275 = pneg %p161
        %s276 = sand.u32 %s151, 1
        %s277 = scalar_lea.sflag [#allocation6], %s276
        %s278 = sand.u32 %s151, 1
        %s279 = smul.addr %s278, 8
        %s280 = scalar_lea.vmem [#allocation9], %s279
        %s281 = smul.u32 2, %s36
        %s282 = smul.u32 2, %s36
        %s283 = smul.u32 2, %s36
        %s284 = sld [smem:[#allocation3 + %s35]]
        %v285 = vld [vmem:[%s1] sm:$0xf]
        %v286 = vld [vmem:[%s242] sm:$0xff]
        %v287 = vld [vmem:[%s251] sm:$0xff]
        %v288 = vstv %s284
        %v289 = vmul.f32 %v285, %v288
        %v290 = vld [vmem:[%s2] sm:$0xf]
        %292 = vrot.lane.b32.xlu0 %v290, 8
        %v293 = vpop.permute.xlu0 %292
        %v295 = vadd.f32 %v289, %v293
        %297 = vset.pattern.permute.xlu0 8
        %298 = vperm.xlu0 %297, %v295
        %v299 = vpop.permute.xlu0 %298
        %302 = vset.pattern.permute.xlu0 0
        %303 = vperm.xlu0 %302, %v285
        %v304 = vpop.permute.xlu0 %303
        %v307 = vlaneseq
        %v308 = vshrl.u32 %v307, 7
        %v309 = vsub.s32 0, %v308
        %v310 = vrot.slane %v286, %v309
        %v311 = vlaneseq
        %v312 = vshrl.u32 %v311, 7
        %v313 = vsub.s32 4, %v312
        %v314 = vrot.slane %v286, %v313
        %v317 = vlaneseq
        %v318 = vshrl.u32 %v317, 7
        %v319 = vsub.s32 0, %v318
        %v320 = vrot.slane %v310, %v319
        %v321 = vlaneseq
        %v322 = vshrl.u32 %v321, 7
        %v323 = vsub.s32 0, %v322
        %v324 = vrot.slane %v314, %v323
        %v325 = vmul.f32 %v304, %v320
        %v326 = vmul.f32 %v304, %v324
        %v327 = vadd.f32 %v299, %v325
        %v328 = vadd.f32 %v299, %v326
        %329 = vset.pattern.permute.xlu0 4
        %330 = vperm.xlu0 %329, %v285
        %v331 = vpop.permute.xlu0 %330
        %v334 = vlaneseq
        %v335 = vshrl.u32 %v334, 7
        %v336 = vsub.s32 0, %v335
        %v337 = vrot.slane %v287, %v336
        %v338 = vlaneseq
        %v339 = vshrl.u32 %v338, 7
        %v340 = vsub.s32 4, %v339
        %v341 = vrot.slane %v287, %v340
        %v344 = vlaneseq
        %v345 = vshrl.u32 %v344, 7
        %v346 = vsub.s32 0, %v345
        %v347 = vrot.slane %v337, %v346
        %v348 = vlaneseq
        %v349 = vshrl.u32 %v348, 7
        %v350 = vsub.s32 0, %v349
        %v351 = vrot.slane %v341, %v350
        %v352 = vmul.f32 %v331, %v347
        %v353 = vmul.f32 %v331, %v351
        %v354 = vadd.f32 %v327, %v352
        %v355 = vadd.f32 %v328, %v353
        %356 = vset.pattern.permute.xlu0 1
        %357 = vperm.xlu0 %356, %v285
        %v358 = vpop.permute.xlu0 %357
        %v360 = vlaneseq
        %v361 = vshrl.u32 %v360, 7
        %v362 = vsub.s32 1, %v361
        %v363 = vrot.slane %v286, %v362
        %v364 = vlaneseq
        %v365 = vshrl.u32 %v364, 7
        %v366 = vsub.s32 5, %v365
        %v367 = vrot.slane %v286, %v366
        %v370 = vlaneseq
        %v371 = vshrl.u32 %v370, 7
        %v372 = vsub.s32 1, %v371
        %v373 = vrot.slane %v363, %v372
        %v374 = vlaneseq
        %v375 = vshrl.u32 %v374, 7
        %v376 = vsub.s32 1, %v375
        %v377 = vrot.slane %v367, %v376
        %v378 = vmul.f32 %v358, %v373
        %v379 = vmul.f32 %v358, %v377
        %v380 = vadd.f32 %v354, %v378
        %v381 = vadd.f32 %v355, %v379
        %382 = vset.pattern.permute.xlu0 5
        %383 = vperm.xlu0 %382, %v285
        %v384 = vpop.permute.xlu0 %383
        %v386 = vlaneseq
        %v387 = vshrl.u32 %v386, 7
        %v388 = vsub.s32 1, %v387
        %v389 = vrot.slane %v287, %v388
        %v390 = vlaneseq
        %v391 = vshrl.u32 %v390, 7
        %v392 = vsub.s32 5, %v391
        %v393 = vrot.slane %v287, %v392
        %v396 = vlaneseq
        %v397 = vshrl.u32 %v396, 7
        %v398 = vsub.s32 1, %v397
        %v399 = vrot.slane %v389, %v398
        %v400 = vlaneseq
        %v401 = vshrl.u32 %v400, 7
        %v402 = vsub.s32 1, %v401
        %v403 = vrot.slane %v393, %v402
        %v404 = vmul.f32 %v384, %v399
        %v405 = vmul.f32 %v384, %v403
        %v406 = vadd.f32 %v380, %v404
        %v407 = vadd.f32 %v381, %v405
        %408 = vset.pattern.permute.xlu0 2
        %409 = vperm.xlu0 %408, %v285
        %v410 = vpop.permute.xlu0 %409
        %v412 = vlaneseq
        %v413 = vshrl.u32 %v412, 7
        %v414 = vsub.s32 2, %v413
        %v415 = vrot.slane %v286, %v414
        %v416 = vlaneseq
        %v417 = vshrl.u32 %v416, 7
        %v418 = vsub.s32 6, %v417
        %v419 = vrot.slane %v286, %v418
        %v422 = vlaneseq
        %v423 = vshrl.u32 %v422, 7
        %v424 = vsub.s32 2, %v423
        %v425 = vrot.slane %v415, %v424
        %v426 = vlaneseq
        %v427 = vshrl.u32 %v426, 7
        %v428 = vsub.s32 2, %v427
        %v429 = vrot.slane %v419, %v428
        %v430 = vmul.f32 %v410, %v425
        %v431 = vmul.f32 %v410, %v429
        %v432 = vadd.f32 %v406, %v430
        %v433 = vadd.f32 %v407, %v431
        %434 = vset.pattern.permute.xlu0 6
        %435 = vperm.xlu0 %434, %v285
        %v436 = vpop.permute.xlu0 %435
        %v438 = vlaneseq
        %v439 = vshrl.u32 %v438, 7
        %v440 = vsub.s32 2, %v439
        %v441 = vrot.slane %v287, %v440
        %v442 = vlaneseq
        %v443 = vshrl.u32 %v442, 7
        %v444 = vsub.s32 6, %v443
        %v445 = vrot.slane %v287, %v444
        %v448 = vlaneseq
        %v449 = vshrl.u32 %v448, 7
        %v450 = vsub.s32 2, %v449
        %v451 = vrot.slane %v441, %v450
        %v452 = vlaneseq
        %v453 = vshrl.u32 %v452, 7
        %v454 = vsub.s32 2, %v453
        %v455 = vrot.slane %v445, %v454
        %v456 = vmul.f32 %v436, %v451
        %v457 = vmul.f32 %v436, %v455
        %v458 = vadd.f32 %v432, %v456
        %v459 = vadd.f32 %v433, %v457
        %460 = vset.pattern.permute.xlu0 3
        %461 = vperm.xlu0 %460, %v285
        %v462 = vpop.permute.xlu0 %461
        %v464 = vlaneseq
        %v465 = vshrl.u32 %v464, 7
        %v466 = vsub.s32 3, %v465
        %v467 = vrot.slane %v286, %v466
        %v468 = vlaneseq
        %v469 = vshrl.u32 %v468, 7
        %v470 = vsub.s32 7, %v469
        %v471 = vrot.slane %v286, %v470
        %v474 = vlaneseq
        %v475 = vshrl.u32 %v474, 7
        %v476 = vsub.s32 3, %v475
        %v477 = vrot.slane %v467, %v476
        %v478 = vlaneseq
        %v479 = vshrl.u32 %v478, 7
        %v480 = vsub.s32 3, %v479
        %v481 = vrot.slane %v471, %v480
        %v482 = vmul.f32 %v462, %v477
        %v483 = vmul.f32 %v462, %v481
        %v484 = vadd.f32 %v458, %v482
        %v485 = vadd.f32 %v459, %v483
        %486 = vset.pattern.permute.xlu0 7
        %487 = vperm.xlu0 %486, %v285
        %v488 = vpop.permute.xlu0 %487
        %v490 = vlaneseq
        %v491 = vshrl.u32 %v490, 7
        %v492 = vsub.s32 3, %v491
        %v493 = vrot.slane %v287, %v492
        %v494 = vlaneseq
        %v495 = vshrl.u32 %v494, 7
        %v496 = vsub.s32 7, %v495
        %v497 = vrot.slane %v287, %v496
        %v500 = vlaneseq
        %v501 = vshrl.u32 %v500, 7
        %v502 = vsub.s32 3, %v501
        %v503 = vrot.slane %v493, %v502
        %v504 = vlaneseq
        %v505 = vshrl.u32 %v504, 7
        %v506 = vsub.s32 3, %v505
        %v507 = vrot.slane %v497, %v506
        %v508 = vmul.f32 %v488, %v503
        %v509 = vmul.f32 %v488, %v507
        %v510 = vadd.f32 %v484, %v508
        %v511 = vadd.f32 %v485, %v509
        %v512 = vmax.f32 %v510, 0.0
        %v513 = vmax.f32 %v511, 0.0
        %v516 = vcombine.low %v512, %v513
        %518 = vst [vmem:[%s280] sm:$0xff] %v516
        %s519 = sand.u32 %s151, 1
        %s520 = scalar_lea.sflag [#allocation6], %s519
        %s521 = sand.u32 %s151, 1
        %s522 = smul.addr %s521, 8
        %s523 = scalar_lea.vmem [#allocation9], %s522
        // Predicated region
        $region45: #{tpu_custom_call.1} parent=35 // pred_check
          %p524 = pneg %p161
        $region46: #{tpu_custom_call.1} parent=35 // pred_check_branch
          %526 = sbr.rel (%p524) target = $region48
        $region47: #{tpu_custom_call.1} parent=35 // pred_region
          %s527 = smul.u32 2, %s36
          %s529 = ssub.s32 128, 128
          %530 = vsyncadd %s520, %s529
          %s531 = smul.addr %s35, 2
          %s532 = sadd.s32 %s527, %s531
          %s533 = smul.addr %s532, 64
          %s534 = scalar_lea.hbm %s5, %s533
          %s536 = sshll.u32 %s523, 4
          %s537 = int_to_ptr.vmem [resolvable:$true] %s536
          %539 = dma.vmem_to_hbm [thread:$0]  %s537, 128, %s534, %s520
        $region48: #{tpu_custom_call.1} parent=35 // pred_fallthru
          _
      $region36: #{tpu_custom_call.1} parent=5 // pred_fallthru
        _
      %p540 = scmp.le.s32.totalorder 2, %s26
      // Predicated region
      $region49: #{tpu_custom_call.1} parent=5 // pred_check
        %p541 = pneg %p540
      $region50: #{tpu_custom_call.1} parent=5 // pred_check_branch
        %543 = sbr.rel (%p541) target = $region52
      $region51: #{tpu_custom_call.1} parent=5 // pred_region
        %s544 = ssub.s32 %s26, 2
        // Predicated region
        $region53: #{tpu_custom_call.1} parent=51 // pred_check
          %p545 = pneg %p167
        $region54: #{tpu_custom_call.1} parent=51 // pred_check_branch
          %547 = sbr.rel (%p545) target = $region56
        $region55: #{tpu_custom_call.1} parent=51 // pred_region
          %s548 = sand.u32 %s152, 1
          %s549 = scalar_lea.sflag [#allocation6], %s548
          %s550 = sand.u32 %s152, 1
          %s551 = smul.addr %s550, 8
          %s552 = scalar_lea.vmem [#allocation9], %s551
          %553 = dma.done %s549, 128
        $region56: #{tpu_custom_call.1} parent=51 // pred_fallthru
          _
      $region52: #{tpu_custom_call.1} parent=5 // pred_fallthru
        _
    $region6: #{tpu_custom_call.1} parent=1 // loop_footer
      %s30 = sadd.s32 1, %s26
    $region7: #{tpu_custom_call.1} parent=1 // loop_footer_branch
      %25 = sbr.rel target = $region3
    $region8: #{tpu_custom_call.1} parent=1 // loop_exit
      _
    %554 = vsyncpa [#allocation5], 1
    %s555 = scalar_lea.sflag [#allocation5], 1
    %556 = vsyncpa %s555, 1
    %557 = vsyncpa [#allocation8], 1
    %s558 = scalar_lea.sflag [#allocation8], 1
    %559 = vsyncpa %s558, 1
    %560 = vsyncpa [#allocation6], 1
    %s561 = scalar_lea.sflag [#allocation6], 1
    %562 = vsyncpa %s561, 1

</llo_original>
